<compile_context>
chip_gen: v5e
topology: v5e:2x2
jax: 0.10.0
libtpu: 0.0.40
codegen_flags: <defaults>
</compile_context>

<pallas_src>
import functools

import jax
import jax.numpy as jnp
from jax.experimental import pallas as pl
from jax.experimental.pallas import tpu as pltpu


def _round_up(x, m):
    return ((x + m - 1) // m) * m


def _default_act_dtype():
    """bf16 activations where the EUP supports bf16 (v6e/v7x); f32 otherwise."""
    try:
        kind = jax.devices()[0].device_kind.lower()
    except Exception:
        return jnp.float32
    for old in ("v2", "v3", "v4", "v5"):
        if old in kind:
            return jnp.float32
    return jnp.bfloat16


def _choose_tile_m(m_pad, tile_m):
    """Largest 128-multiple tile that divides m_pad, capped by tile_m and by
    m_pad//2 (>= 2 grid steps so the parallel M axis can use both TCs on v7x)."""
    q = m_pad // 128                       # m_pad is always a multiple of 128
    cap = max(1, min(tile_m // 128, q))
    if q >= 2:
        cap = max(1, min(cap, q // 2))
    best, d = 1, 1
    while d * d <= q:
        if q % d == 0:
            for cand in (d, q // d):
                if best < cand <= cap:
                    best = cand
        d += 1
    return 128 * best


def _np_kernel(*refs, n_species, act_dtype, have_const):
    # With constants:
    #   state_ref: [S, TM]   (S = n_species + O; rows [:n_species] features,
    #                         rows [n_species:] the trailing "variance" states)
    #   const_ref: [C, TM]   per-sample constants, lane-dense
    #   ws_ref:    [H, n_species]  hidden weight columns for the state features
    #   wc_ref:    [H, C]          hidden weight columns for the constants
    #   bh_ref:    [H, 1]    effective hidden bias (scalar t already folded in)
    #   whead_ref: [2O, H]   [Wp; Wd] stacked, stored in act_dtype
    #   bhead_ref: [2O, 1]   [bp; bd]
    #   out_ref:   [O, TM]   vrs^T  (lane-dense stores)
    if have_const:
        (state_ref, const_ref, ws_ref, wc_ref,
         bh_ref, whead_ref, bhead_ref, out_ref) = refs
    else:
        state_ref, ws_ref, bh_ref, whead_ref, bhead_ref, out_ref = refs
        const_ref = wc_ref = None

    feat = state_ref[:n_species, :]              # (n_species, TM)
    var = state_ref[n_species:, :]               # (O, TM)

    pre_h = (jnp.dot(ws_ref[...], feat, preferred_element_type=jnp.float32)
             + bh_ref[...])
    if have_const:
        pre_h = pre_h + jnp.dot(wc_ref[...], const_ref[...],
                                preferred_element_type=jnp.float32)

    # EUP-heavy work in act_dtype (bf16 on v6e/v7x doubles EUP headroom and halves
    # h's VMEM/vreg footprint; f32 on v5e).  MXU accumulation stays f32.
    h = jnp.tanh(pre_h.astype(act_dtype))
    pre_z = (jnp.dot(whead_ref[...], h, preferred_element_type=jnp.float32)
             + bhead_ref[...])
    # sigmoid: exp (the EUP part) in act_dtype, the cheap 1/(1+e) in f32.
    e = jnp.exp(-(pre_z.astype(act_dtype))).astype(jnp.float32)
    z = 1.0 / (1.0 + e)

    n_out = out_ref.shape[0]
    xa = z[:n_out, :]
    xd = z[n_out:, :]
    out_ref[...] = xa - xd * var


def neural_precisions_forward(t, state, constants, params,
                              n_batch, n_iwae, n_outputs,
                              tile_m=32768, act_dtype=None):
    """Glue: one transpose (+pad to 128 lanes if needed) in JAX, hot path in Pallas."""
    O = n_outputs
    M = n_batch * n_iwae
    S = state.shape[-1]
    n_species = S - O
    if act_dtype is None:
        act_dtype = _default_act_dtype()

    # Single transpose pass: samples on the 128-lane axis -> lane-dense loads/stores.
    state_t = state.reshape(M, S).astype(jnp.float32).T            # (S, M)

    wh = params["wh"].astype(jnp.float32)        # (H, 1 + n_species + n_const)
    bh = params["bh"].astype(jnp.float32)        # (H, 1)
    bhead = params["bhead"].astype(jnp.float32)  # (2O, 1)
    whead = params["whead"].astype(act_dtype)    # (2O, H) -> bf16 feeds bf16 h

    # Fold the scalar time input into the hidden bias: bh_eff = bh + t * Wh[:, 0].
    t_f = jnp.asarray(t, jnp.float32)
    bh_eff = bh + t_f * wh[:, 0:1]               # (H, 1)
    ws = wh[:, 1:1 + n_species]                  # (H, n_species)
    H = wh.shape[0]

    have_const = constants is not None
    if have_const:
        n_const = constants.shape[-1]
        const_t = constants.reshape(M, n_const).astype(jnp.float32).T   # (C, M)
        wc = wh[:, 1 + n_species:]               # (H, n_const)
    else:
        n_const = 0

    # Pad M only up to a 128-lane multiple (no pad-to-tile copy, no garbage tiles).
    m_pad = _round_up(M, 128)
    if m_pad != M:
        state_t = jnp.pad(state_t, ((0, 0), (0, m_pad - M)))
        if have_const:
            const_t = jnp.pad(const_t, ((0, 0), (0, m_pad - M)))

    tm = _choose_tile_m(m_pad, tile_m)
    grid = (m_pad // tm,)

    F = n_species + n_const
    cost = pl.CostEstimate(
        flops=2 * M * H * (F + 2 * O),
        transcendentals=(H + 2 * O) * M,
        bytes_accessed=(S + n_const + O) * M * 4,
    )

    if have_const:
        in_specs = [
            pl.BlockSpec((S, tm), lambda i: (0, i)),          # state^T tile
            pl.BlockSpec((n_const, tm), lambda i: (0, i)),    # constants^T tile
            pl.BlockSpec((H, n_species), lambda i: (0, 0)),   # Wh (species cols)
            pl.BlockSpec((H, n_const), lambda i: (0, 0)),     # Wh (constant cols)
            pl.BlockSpec((H, 1), lambda i: (0, 0)),           # bh_eff
            pl.BlockSpec((2 * O, H), lambda i: (0, 0)),       # [Wp; Wd]
            pl.BlockSpec((2 * O, 1), lambda i: (0, 0)),       # [bp; bd]
        ]
        inputs = (state_t, const_t, ws, wc, bh_eff, whead, bhead)
    else:
        in_specs = [
            pl.BlockSpec((S, tm), lambda i: (0, i)),
            pl.BlockSpec((H, n_species), lambda i: (0, 0)),
            pl.BlockSpec((H, 1), lambda i: (0, 0)),
            pl.BlockSpec((2 * O, H), lambda i: (0, 0)),
            pl.BlockSpec((2 * O, 1), lambda i: (0, 0)),
        ]
        inputs = (state_t, ws, bh_eff, whead, bhead)

    kernel = functools.partial(_np_kernel, n_species=n_species,
                               act_dtype=act_dtype, have_const=have_const)

    out_t = pl.pallas_call(
        kernel,
        out_shape=jax.ShapeDtypeStruct((O, m_pad), jnp.float32),
        grid=grid,
        in_specs=in_specs,
        out_specs=pl.BlockSpec((O, tm), lambda i: (0, i)),
        compiler_params=pltpu.CompilerParams(
            dimension_semantics=("parallel",)),
        cost_estimate=cost,
    )(*inputs)

    out = out_t[:, :M].T                          # (M, O)
    return out.reshape(n_batch, n_iwae, O)


def init_params(key, n_inputs, n_hidden, n_outputs):
    """Deterministic synthetic init mirroring the PyTorch __init__ shapes.

    Weights are kept in torch nn.Linear layout [out, in]; the two head layers are
    packed into a single (2*n_outputs, n_hidden) weight / (2*n_outputs, 1) bias so
    the kernel does one fused MXU matmul for both heads.  Xavier-uniform bounds
    match torch; biases use torch's default U(-1/sqrt(fan_in), 1/sqrt(fan_in)).
    """
    K = n_inputs + 1
    ks = jax.random.split(key, 6)

    def xavier(k, fan_out, fan_in, gain=1.0):
        bound = gain * (6.0 / (fan_in + fan_out)) ** 0.5
        return jax.random.uniform(k, (fan_out, fan_in), jnp.float32, -bound, bound)

    def bias(k, n, fan_in):
        bound = 1.0 / (fan_in ** 0.5)
        return jax.random.uniform(k, (n, 1), jnp.float32, -bound, bound)

    wp = xavier(ks[2], n_outputs, n_hidden, 0.5)   # prec_production (gain=0.5)
    bp = bias(ks[3], n_outputs, n_hidden)
    wd = xavier(ks[4], n_outputs, n_hidden, 1.0)   # prec_degradation (gain=1)
    bd = bias(ks[5], n_outputs, n_hidden)

    return dict(
        wh=xavier(ks[0], n_hidden, K),             # prec_hidden, [H, K]
        bh=bias(ks[1], n_hidden, K),               # [H, 1]
        whead=jnp.concatenate([wp, wd], axis=0),   # [2O, H]
        bhead=jnp.concatenate([bp, bd], axis=0),   # [2O, 1]
    )


def _reference(t, state, constants, params, n_batch, n_iwae, n_outputs):
    """Plain-JAX reference in the original (row-sample) orientation."""
    O = n_outputs
    reshaped_state = state[:, :, :-O]
    var_state = state[:, :, -O:]
    t_expanded = jnp.broadcast_to(
        jnp.reshape(jnp.asarray(t, state.dtype), (1, 1, 1)), (n_batch, n_iwae, 1))
    parts = [t_expanded, reshaped_state]
    if constants is not None:
        parts.append(constants)
    x = jnp.concatenate(parts, axis=2)
    h = jnp.tanh(x @ params["wh"].T + params["bh"][:, 0])
    wp, wd = params["whead"][:O], params["whead"][O:]
    bp, bd = params["bhead"][:O, 0], params["bhead"][O:, 0]
    xa = jax.nn.sigmoid(h @ wp.T + bp)
    xd = jax.nn.sigmoid(h @ wd.T + bd)
    return xa - xd * var_state


if __name__ == "__main__":
    key = jax.random.PRNGKey(0)

    # ---- case 1: small shapes, f32 activations -> tight numerical check ------
    n_batch, n_iwae = 2, 8
    n_outputs = 4          # trailing variance states
    n_species = 4          # leading latent states
    n_const = 2            # per-sample constants
    n_inputs = n_species + n_const
    n_hidden = 32

    k_state, k_const, k_params, k_state2, k_const2 = jax.random.split(key, 5)
    t = jnp.float32(0.5)
    state = jax.random.normal(
        k_state, (n_batch, n_iwae, n_species + n_outputs), dtype=jnp.float32)
    constants = jax.random.normal(
        k_const, (n_batch, n_iwae, n_const), dtype=jnp.float32)
    params = init_params(k_params, n_inputs, n_hidden, n_outputs)

    vrs = neural_precisions_forward(t, state, constants, params,
                                    n_batch, n_iwae, n_outputs,
                                    act_dtype=jnp.float32)
    vrs = jax.block_until_ready(vrs)
    ref = _reference(t, state, constants, params, n_batch, n_iwae, n_outputs)
    assert vrs.shape == (n_batch, n_iwae, n_outputs)
    assert jnp.allclose(vrs, ref, atol=1e-4, rtol=1e-4), "mismatch (with constants)"

    # constants=None branch (parameters re-drawn for the smaller n_inputs).
    params_nc = init_params(k_params, n_species, n_hidden, n_outputs)
    vrs_nc = neural_precisions_forward(t, state, None, params_nc,
                                       n_batch, n_iwae, n_outputs,
                                       act_dtype=jnp.float32)
    vrs_nc = jax.block_until_ready(vrs_nc)
    ref_nc = _reference(t, state, None, params_nc, n_batch, n_iwae, n_outputs)
    assert jnp.allclose(vrs_nc, ref_nc, atol=1e-4, rtol=1e-4), "mismatch (no constants)"

    # ---- case 2: larger M to exercise the multi-step, pipelined grid path ----
    n_batch2, n_iwae2 = 16, 128        # M = 2048 -> tm = 1024, grid = (2,)
    state2 = jax.random.normal(
        k_state2, (n_batch2, n_iwae2, n_species + n_outputs), dtype=jnp.float32)
    constants2 = jax.random.normal(
        k_const2, (n_batch2, n_iwae2, n_const), dtype=jnp.float32)
    ref2 = _reference(t, state2, constants2, params, n_batch2, n_iwae2, n_outputs)

    # 2a: f32 activations -> tight check of the tiled path.
    vrs2_f32 = neural_precisions_forward(t, state2, constants2, params,
                                         n_batch2, n_iwae2, n_outputs,
                                         act_dtype=jnp.float32)
    vrs2_f32 = jax.block_until_ready(vrs2_f32)
    assert jnp.allclose(vrs2_f32, ref2, atol=1e-4, rtol=1e-4), "mismatch (large M, f32)"

    # 2b: default activation dtype (bf16 on v6e/v7x, f32 on v5e) -> tolerance
    #     matched to the activation precision.
    act = _default_act_dtype()
    vrs2 = neural_precisions_forward(t, state2, constants2, params,
                                     n_batch2, n_iwae2, n_outputs)
    vrs2 = jax.block_until_ready(vrs2)
    atol, rtol = (7.5e-2, 5e-2) if act == jnp.bfloat16 else (1e-4, 1e-4)
    assert jnp.all(jnp.isfinite(vrs2)), "non-finite output (large M, fast path)"
    assert jnp.allclose(vrs2, ref2, atol=atol, rtol=rtol), "mismatch (large M, fast path)"

    print("KERNEL_OK")
</pallas_src>

<mosaic_0001>
module attributes {stable_mosaic.version = 11 : i64} {
  func.func @_np_kernel(%arg0: i32, %arg1: memref<8x128xf32, #tpu.memory_space<vmem>>, %arg2: memref<2x128xf32, #tpu.memory_space<vmem>>, %arg3: memref<32x4xf32, #tpu.memory_space<vmem>>, %arg4: memref<32x2xf32, #tpu.memory_space<vmem>>, %arg5: memref<32x1xf32, #tpu.memory_space<vmem>>, %arg6: memref<8x32xf32, #tpu.memory_space<vmem>>, %arg7: memref<8x1xf32, #tpu.memory_space<vmem>>, %arg8: memref<4x128xf32, #tpu.memory_space<vmem>>) attributes {dimension_semantics = [#tpu.dimension_semantics<parallel>], iteration_bounds = array<i64: 1>, scalar_prefetch = 0 : i64, scratch_operands = 0 : i64, tpu.core_type = #tpu.core_type<tc>, window_params = [{transform_indices = @transform_0, window_bounds = array<i64: 8, 128>}, {transform_indices = @transform_1, window_bounds = array<i64: 2, 128>}, {pipeline_mode = #tpu.pipeline_mode<synchronous>, transform_indices = @transform_2, window_bounds = array<i64: 32, 4>}, {pipeline_mode = #tpu.pipeline_mode<synchronous>, transform_indices = @transform_3, window_bounds = array<i64: 32, 2>}, {pipeline_mode = #tpu.pipeline_mode<synchronous>, transform_indices = @transform_4, window_bounds = array<i64: 32, 1>}, {pipeline_mode = #tpu.pipeline_mode<synchronous>, transform_indices = @transform_5, window_bounds = array<i64: 8, 32>}, {pipeline_mode = #tpu.pipeline_mode<synchronous>, transform_indices = @transform_6, window_bounds = array<i64: 8, 1>}, {transform_indices = @transform_7, window_bounds = array<i64: 4, 128>}]} {
    %c0 = arith.constant 0 : index
    %c0_0 = arith.constant 0 : index
    %0 = vector.load %arg1[%c0, %c0_0] : memref<8x128xf32, #tpu.memory_space<vmem>>, vector<4x128xf32>
    %c4 = arith.constant 4 : index
    %c0_1 = arith.constant 0 : index
    %1 = vector.load %arg1[%c4, %c0_1] : memref<8x128xf32, #tpu.memory_space<vmem>>, vector<4x128xf32>
    %c0_2 = arith.constant 0 : index
    %c0_3 = arith.constant 0 : index
    %2 = vector.load %arg3[%c0_2, %c0_3] : memref<32x4xf32, #tpu.memory_space<vmem>>, vector<32x4xf32>
    %cst = arith.constant dense<0.000000e+00> : vector<32x128xf32>
    %3 = tpu.matmul %2, %0, %cst {dimension_numbers = #tpu.dot_dimension_numbers<[1], [0], [0], [1], [0, 0, 1, 1], [], []>} : vector<32x4xf32>, vector<4x128xf32>, vector<32x128xf32> -> vector<32x128xf32>
    %c0_4 = arith.constant 0 : index
    %c0_5 = arith.constant 0 : index
    %4 = vector.load %arg5[%c0_4, %c0_5] : memref<32x1xf32, #tpu.memory_space<vmem>>, vector<32x1xf32>
    %5 = vector.broadcast %4 : vector<32x1xf32> to vector<32x128xf32>
    %6 = arith.addf %3, %5 : vector<32x128xf32>
    %c0_6 = arith.constant 0 : index
    %c0_7 = arith.constant 0 : index
    %7 = vector.load %arg4[%c0_6, %c0_7] : memref<32x2xf32, #tpu.memory_space<vmem>>, vector<32x2xf32>
    %c0_8 = arith.constant 0 : index
    %c0_9 = arith.constant 0 : index
    %8 = vector.load %arg2[%c0_8, %c0_9] : memref<2x128xf32, #tpu.memory_space<vmem>>, vector<2x128xf32>
    %cst_10 = arith.constant dense<0.000000e+00> : vector<32x128xf32>
    %9 = tpu.matmul %7, %8, %cst_10 {dimension_numbers = #tpu.dot_dimension_numbers<[1], [0], [0], [1], [0, 0, 1, 1], [], []>} : vector<32x2xf32>, vector<2x128xf32>, vector<32x128xf32> -> vector<32x128xf32>
    %10 = arith.addf %6, %9 : vector<32x128xf32>
    %11 = math.tanh %10 : vector<32x128xf32>
    %c0_11 = arith.constant 0 : index
    %c0_12 = arith.constant 0 : index
    %12 = vector.load %arg6[%c0_11, %c0_12] : memref<8x32xf32, #tpu.memory_space<vmem>>, vector<8x32xf32>
    %cst_13 = arith.constant dense<0.000000e+00> : vector<8x128xf32>
    %13 = tpu.matmul %12, %11, %cst_13 {dimension_numbers = #tpu.dot_dimension_numbers<[1], [0], [0], [1], [0, 0, 1, 1], [], []>} : vector<8x32xf32>, vector<32x128xf32>, vector<8x128xf32> -> vector<8x128xf32>
    %c0_14 = arith.constant 0 : index
    %c0_15 = arith.constant 0 : index
    %14 = vector.load %arg7[%c0_14, %c0_15] : memref<8x1xf32, #tpu.memory_space<vmem>>, vector<8x1xf32>
    %15 = vector.broadcast %14 : vector<8x1xf32> to vector<8x128xf32>
    %16 = arith.addf %13, %15 : vector<8x128xf32>
    %cst_16 = arith.constant 0.000000e+00 : f32
    %17 = vector.broadcast %cst_16 : f32 to vector<8x128xf32>
    %18 = arith.subf %17, %16 : vector<8x128xf32>
    %19 = math.exp %18 : vector<8x128xf32>
    %cst_17 = arith.constant 1.000000e+00 : f32
    %20 = vector.broadcast %cst_17 : f32 to vector<8x128xf32>
    %21 = arith.addf %20, %19 : vector<8x128xf32>
    %cst_18 = arith.constant 1.000000e+00 : f32
    %22 = vector.broadcast %cst_18 : f32 to vector<8x128xf32>
    %23 = arith.divf %22, %21 : vector<8x128xf32>
    %24 = vector.extract_strided_slice %23 {offsets = [0, 0], sizes = [4, 128], strides = [1, 1]} : vector<8x128xf32> to vector<4x128xf32>
    %25 = vector.extract_strided_slice %23 {offsets = [4, 0], sizes = [4, 128], strides = [1, 1]} : vector<8x128xf32> to vector<4x128xf32>
    %26 = arith.mulf %25, %1 : vector<4x128xf32>
    %27 = arith.subf %24, %26 : vector<4x128xf32>
    %c0_19 = arith.constant 0 : index
    %c0_20 = arith.constant 0 : index
    %28 = vector.load %arg8[%c0_19, %c0_20] : memref<4x128xf32, #tpu.memory_space<vmem>>, vector<4x128xf32>
    tpu.vector_store %arg8[%c0_19, %c0_20], %27 {strides = array<i32>} : memref<4x128xf32, #tpu.memory_space<vmem>>, vector<4x128xf32>,
    return
  }
  func.func @transform_0(%arg0: i32) -> (i32, i32) {
    %c0_i32 = arith.constant 0 : i32
    %c0_i32_0 = arith.constant 0 : i32
    return %c0_i32, %arg0 : i32, i32
  }
  func.func @transform_1(%arg0: i32) -> (i32, i32) {
    %c0_i32 = arith.constant 0 : i32
    %c0_i32_0 = arith.constant 0 : i32
    return %c0_i32, %arg0 : i32, i32
  }
  func.func @transform_2(%arg0: i32) -> (i32, i32) {
    %c0_i32 = arith.constant 0 : i32
    %c0_i32_0 = arith.constant 0 : i32
    %c0_i32_1 = arith.constant 0 : i32
    return %c0_i32, %c0_i32_0 : i32, i32
  }
  func.func @transform_3(%arg0: i32) -> (i32, i32) {
    %c0_i32 = arith.constant 0 : i32
    %c0_i32_0 = arith.constant 0 : i32
    %c0_i32_1 = arith.constant 0 : i32
    return %c0_i32, %c0_i32_0 : i32, i32
  }
  func.func @transform_4(%arg0: i32) -> (i32, i32) {
    %c0_i32 = arith.constant 0 : i32
    %c0_i32_0 = arith.constant 0 : i32
    %c0_i32_1 = arith.constant 0 : i32
    return %c0_i32, %c0_i32_0 : i32, i32
  }
  func.func @transform_5(%arg0: i32) -> (i32, i32) {
    %c0_i32 = arith.constant 0 : i32
    %c0_i32_0 = arith.constant 0 : i32
    %c0_i32_1 = arith.constant 0 : i32
    return %c0_i32, %c0_i32_0 : i32, i32
  }
  func.func @transform_6(%arg0: i32) -> (i32, i32) {
    %c0_i32 = arith.constant 0 : i32
    %c0_i32_0 = arith.constant 0 : i32
    %c0_i32_1 = arith.constant 0 : i32
    return %c0_i32, %c0_i32_0 : i32, i32
  }
  func.func @transform_7(%arg0: i32) -> (i32, i32) {
    %c0_i32 = arith.constant 0 : i32
    %c0_i32_0 = arith.constant 0 : i32
    return %c0_i32, %arg0 : i32, i32
  }
}

</mosaic_0001>

<llo_original>
// kernel: tpu_custom_call.1
$region0: #{tpu_custom_call.1}
  #allocation0 [shape = 'u32[]', space=smem, size = 0x4, offset = 0x4, fixed_abs, tag = 'smem constant byte address 0x4 - core index']
  #allocation1 [shape = 'u32[72,128]{1,0:T(1,128)}', space=vmem, size = 0x9000, scoped, tag = 'internal scratch']
  %s0 = inlined_call_operand.vmem [shape: f32[8,128], index: 0, kind: input, shape index: {}]
  %s1 = inlined_call_operand.vmem [shape: f32[2,128], index: 1, kind: input, shape index: {}]
  %s2 = inlined_call_operand.vmem [shape: f32[32,4], index: 2, kind: input, shape index: {}]
  %s3 = inlined_call_operand.vmem [shape: f32[32,2], index: 3, kind: input, shape index: {}]
  %s4 = inlined_call_operand.vmem [shape: f32[32,1], index: 4, kind: input, shape index: {}]
  %s5 = inlined_call_operand.vmem [shape: f32[8,32], index: 5, kind: input, shape index: {}]
  %s6 = inlined_call_operand.vmem [shape: f32[8,1], index: 6, kind: input, shape index: {}]
  %s7 = inlined_call_operand.hbm [shape: f32[4,128], index: 7, kind: output, shape index: {}]
  %s8 = sld [smem:[#allocation0]]
  $region38: #{tpu_custom_call.1} parent=0
    _
  %s10 = ssub.s32 1, %s8
  %s11 = scalar_select 0, %s10, %s8
  $region1: #{tpu_custom_call.1} parent=0
    #allocation2 [shape = 'u8[2048]{0}', space=vmem, size = 0x800, scoped, tag = 'output window, operand 0, single buffered']
    #allocation3 [shape = 's32[1]{0}', space=sflag, size = 0x4, scoped, tag = 'scoped memory for tpu_custom_call.1']
    %12 = vsyncpa [#allocation3], 0
    // Predicated region
    $region2: #{tpu_custom_call.1} parent=1 // pred_check
      _
    $region3: #{tpu_custom_call.1} parent=1 // pred_check_branch
      %14 = sbr.rel (0) target = $region5
    $region4: #{tpu_custom_call.1} parent=1 // pred_region
      _
    $region5: #{tpu_custom_call.1} parent=1 // pred_fallthru
      _
    // Predicated region
    $region6: #{tpu_custom_call.1} parent=1 // pred_check
      _
    $region7: #{tpu_custom_call.1} parent=1 // pred_check_branch
      %16 = sbr.rel (0) target = $region9
    $region8: #{tpu_custom_call.1} parent=1 // pred_region
      _
    $region9: #{tpu_custom_call.1} parent=1 // pred_fallthru
      _
    // Predicated region
    $region10: #{tpu_custom_call.1} parent=1 // pred_check
      _
    $region11: #{tpu_custom_call.1} parent=1 // pred_check_branch
      %18 = sbr.rel (0) target = $region13
    $region12: #{tpu_custom_call.1} parent=1 // pred_region
      _
    $region13: #{tpu_custom_call.1} parent=1 // pred_fallthru
      _
    // Predicated region
    $region14: #{tpu_custom_call.1} parent=1 // pred_check
      _
    $region15: #{tpu_custom_call.1} parent=1 // pred_check_branch
      %20 = sbr.rel (0) target = $region17
    $region16: #{tpu_custom_call.1} parent=1 // pred_region
      _
    $region17: #{tpu_custom_call.1} parent=1 // pred_fallthru
      _
    // Predicated region
    $region18: #{tpu_custom_call.1} parent=1 // pred_check
      _
    $region19: #{tpu_custom_call.1} parent=1 // pred_check_branch
      %22 = sbr.rel (0) target = $region21
    $region20: #{tpu_custom_call.1} parent=1 // pred_region
      _
    $region21: #{tpu_custom_call.1} parent=1 // pred_fallthru
      _
    // Predicated region
    $region22: #{tpu_custom_call.1} parent=1 // pred_check
      _
    $region23: #{tpu_custom_call.1} parent=1 // pred_check_branch
      %24 = sbr.rel (0) target = $region25
    $region24: #{tpu_custom_call.1} parent=1 // pred_region
      _
    $region25: #{tpu_custom_call.1} parent=1 // pred_fallthru
      _
    // Predicated region
    $region26: #{tpu_custom_call.1} parent=1 // pred_check
      _
    $region27: #{tpu_custom_call.1} parent=1 // pred_check_branch
      %26 = sbr.rel (0) target = $region29
    $region28: #{tpu_custom_call.1} parent=1 // pred_region
      _
    $region29: #{tpu_custom_call.1} parent=1 // pred_fallthru
      _
    %v27 = vld [vmem:[%s0] sm:$0xf]
    %v28 = vld [vmem:[%s0 + $0x4] sm:$0xf]
    %v29 = vld [vmem:[%s2] sm:$0xff]
    %v30 = vld [vmem:[%s2 + $0x8] sm:$0xff]
    %v31 = vld [vmem:[%s2 + $0x10] sm:$0xff]
    %v32 = vld [vmem:[%s2 + $0x18] sm:$0xff]
    %v33 = vld [vmem:[%s4] sm:$0xff]
    %v34 = vld [vmem:[%s4 + $0x8] sm:$0xff]
    %v35 = vld [vmem:[%s4 + $0x10] sm:$0xff]
    %v36 = vld [vmem:[%s4 + $0x18] sm:$0xff]
    %38 = vset.pattern.permute.xlu0 0
    %39 = vperm.xlu0 %38, %v33
    %v40 = vpop.permute.xlu0 %39
    %43 = vset.pattern.permute.xlu0 0
    %44 = vperm.xlu0 %43, %v34
    %v45 = vpop.permute.xlu0 %44
    %48 = vset.pattern.permute.xlu0 0
    %49 = vperm.xlu0 %48, %v35
    %v50 = vpop.permute.xlu0 %49
    %53 = vset.pattern.permute.xlu0 0
    %54 = vperm.xlu0 %53, %v36
    %v55 = vpop.permute.xlu0 %54
    %vm57 = vcmask 31744
    %v59 = vsel %vm57, %v29, 0
    %v62 = vsel %vm57, %v30, 0
    %v65 = vsel %vm57, %v31, 0
    %v68 = vsel %vm57, %v32, 0
    %vm70 = vcmask 1043456
    %v72 = vsel %vm70, %v27, 0
    %74 = vmatpush.msra.mxu0 0.0
    %75 = vmatpush.msra.mxu0 0.0
    %76 = vmatpush.msra.mxu0 0.0
    %77 = vmatpush.msra.mxu0 0.0
    %78 = vmatpush.msra.mxu0 0.0
    %79 = vmatpush.msra.mxu0 0.0
    %80 = vmatpush.msra.mxu0 0.0
    %81 = vmatpush.msra.mxu0 0.0
    %82 = vmatpush.msra.mxu0 0.0
    %83 = vmatpush.msra.mxu0 0.0
    %84 = vmatpush.msra.mxu0 0.0
    %85 = vmatpush.msra.mxu0 0.0
    %86 = vmatpush.msra.mxu0 0.0
    %87 = vmatpush.msra.mxu0 0.0
    %88 = vmatpush.msra.mxu0 0.0
    %89 = vmatpush.msra.mxu0 %v72
    %90 = vmatmul.f32.gmra.mxu0 %v59
    %v91 = vpop.f32.mrf.mxu0
    %v92 = vadd.f32 %v40, %v91
    %93 = vmatmul.f32.gmra.mxu0 %v62
    %v94 = vpop.f32.mrf.mxu0
    %v95 = vadd.f32 %v45, %v94
    %96 = vmatmul.f32.gmra.mxu0 %v65
    %v97 = vpop.f32.mrf.mxu0
    %v98 = vadd.f32 %v50, %v97
    %99 = vmatmul.f32.gmra.mxu0 %v68
    %v100 = vpop.f32.mrf.mxu0
    %v101 = vadd.f32 %v55, %v100
    %102 = vdwg.mxu0
    %v103 = vld [vmem:[%s3] sm:$0xff]
    %v104 = vld [vmem:[%s3 + $0x8] sm:$0xff]
    %v105 = vld [vmem:[%s3 + $0x10] sm:$0xff]
    %v106 = vld [vmem:[%s3 + $0x18] sm:$0xff]
    %v107 = vld [vmem:[%s1] sm:$0x3]
    %vm108 = vcmask 15360
    %v110 = vsel %vm108, %v103, 0
    %v113 = vsel %vm108, %v104, 0
    %v116 = vsel %vm108, %v105, 0
    %v119 = vsel %vm108, %v106, 0
    %vm121 = vcmask 1041408
    %v123 = vsel %vm121, %v107, 0
    %125 = vmatpush.msra.mxu0 0.0
    %126 = vmatpush.msra.mxu0 0.0
    %127 = vmatpush.msra.mxu0 0.0
    %128 = vmatpush.msra.mxu0 0.0
    %129 = vmatpush.msra.mxu0 0.0
    %130 = vmatpush.msra.mxu0 0.0
    %131 = vmatpush.msra.mxu0 0.0
    %132 = vmatpush.msra.mxu0 0.0
    %133 = vmatpush.msra.mxu0 0.0
    %134 = vmatpush.msra.mxu0 0.0
    %135 = vmatpush.msra.mxu0 0.0
    %136 = vmatpush.msra.mxu0 0.0
    %137 = vmatpush.msra.mxu0 0.0
    %138 = vmatpush.msra.mxu0 0.0
    %139 = vmatpush.msra.mxu0 0.0
    %140 = vmatpush.msra.mxu0 %v123
    %141 = vmatmul.f32.gmra.mxu0 %v110
    %v142 = vpop.f32.mrf.mxu0
    %v143 = vadd.f32 0.0, %v142
    %144 = vmatmul.f32.gmra.mxu0 %v113
    %v145 = vpop.f32.mrf.mxu0
    %v146 = vadd.f32 0.0, %v145
    %147 = vmatmul.f32.gmra.mxu0 %v116
    %v148 = vpop.f32.mrf.mxu0
    %v149 = vadd.f32 0.0, %v148
    %150 = vmatmul.f32.gmra.mxu0 %v119
    %v151 = vpop.f32.mrf.mxu0
    %v152 = vadd.f32 0.0, %v151
    %153 = vdwg.mxu0
    %v154 = vadd.f32 %v92, %v143
    %v155 = vadd.f32 %v95, %v146
    %v156 = vadd.f32 %v98, %v149
    %v157 = vadd.f32 %v101, %v152
    %v158 = vtanh.pop %v154
    %v159 = vtanh.pop %v155
    %v160 = vtanh.pop %v156
    %v161 = vtanh.pop %v157
    %v162 = vld [vmem:[%s5] sm:$0xff]
    %v163 = vld [vmem:[%s6] sm:$0xff]
    %165 = vset.pattern.permute.xlu0 0
    %166 = vperm.xlu0 %165, %v163
    %v167 = vpop.permute.xlu0 %166
    %vm169 = vcmask 261120
    %v171 = vsel %vm169, %v162, 0
    %173 = vmatpush.msra.mxu0 0.0
    %174 = vmatpush.msra.mxu0 0.0
    %175 = vmatpush.msra.mxu0 0.0
    %176 = vmatpush.msra.mxu0 0.0
    %177 = vmatpush.msra.mxu0 0.0
    %178 = vmatpush.msra.mxu0 0.0
    %179 = vmatpush.msra.mxu0 0.0
    %180 = vmatpush.msra.mxu0 0.0
    %181 = vmatpush.msra.mxu0 0.0
    %182 = vmatpush.msra.mxu0 0.0
    %183 = vmatpush.msra.mxu0 0.0
    %184 = vmatpush.msra.mxu0 0.0
    %185 = vmatpush.msra.mxu0 %v161
    %186 = vmatpush.msra.mxu0 %v160
    %187 = vmatpush.msra.mxu0 %v159
    %188 = vmatpush.msra.mxu0 %v158
    %189 = vmatmul.f32.gmra.mxu0 %v171
    %v190 = vpop.f32.mrf.mxu0
    %v191 = vadd.f32 %v167, %v190
    %192 = vdwg.mxu0
    %v193 = vsub.f32 0.0, %v191
    %v194 = vmul.f32 %v193, 1.442695
    %v195 = vpow.pop %v194
    %v196 = vadd.f32 %v195, 1.0
    %v197 = vrcp.pop %v196
    %v198 = vmul.f32 %v196, %v197
    %v199 = vsub.f32 1.0, %v198
    %v200 = vmul.f32 %v197, %v199
    %v201 = vadd.f32 %v197, %v200
    %vm202 = vweird.f32 %v196
    %vm203 = vweird.f32 %v197
    %vm204 = vmor %vm202, %vm203
    %v205 = vsel %vm204, %v197, %v201
    %v206 = vand.u32 2147483647, %v196
    %vm207 = vcmp.eq.f32.partialorder %v206, 8.507059e+37
    %v208 = vand.u32 %v196, 2147483648
    %v209 = vor.u32 1.1754944e-38, %v208
    %v210 = vsel %vm207, %v209, %v205
    %v211 = vmul.f32 1.0, %v210
    %v213 = vrot.slane %v28, 4
    %v215 = vmul.f32 %v211, %v213
    %v217 = vrot.slane %v215, 4
    %v219 = vsub.f32 %v211, %v217
    %220 = vst [vmem:[#allocation2] sm:$0xf] %v219
    // Predicated region
    $region30: #{tpu_custom_call.1} parent=1 // pred_check
      _
    $region31: #{tpu_custom_call.1} parent=1 // pred_check_branch
      %222 = sbr.rel (0) target = $region33
    $region32: #{tpu_custom_call.1} parent=1 // pred_region
      %224 = vsyncadd [#allocation3], 0
      %s226 = sshll.u32 [#allocation2], 4
      %s227 = int_to_ptr.vmem [resolvable:$true] %s226
      %s228 = sshll.u32 %s7, 4
      %s229 = int_to_ptr.hbm [resolvable:$true] %s228
      %231 = dma.vmem_to_hbm [thread:$0]  %s227, 64, %s229, [#allocation3]
    $region33: #{tpu_custom_call.1} parent=1 // pred_fallthru
      _
    // Predicated region
    $region34: #{tpu_custom_call.1} parent=1 // pred_check
      _
    $region35: #{tpu_custom_call.1} parent=1 // pred_check_branch
      %233 = sbr.rel (0) target = $region37
    $region36: #{tpu_custom_call.1} parent=1 // pred_region
      %235 = dma.done [#allocation3], 64
    $region37: #{tpu_custom_call.1} parent=1 // pred_fallthru
      _
    %236 = vsyncpa [#allocation3], 1

</llo_original>
